<compile_context>
chip_gen: v7x
topology: tpu7x:2x2x1
jax: 0.10.0
libtpu: 0.0.40
codegen_flags: <defaults>
</compile_context>

<pallas_src>
import functools

import jax
import jax.numpy as jnp
from jax import lax
from jax.experimental import pallas as pl
from jax.experimental.pallas import tpu as pltpu


STEM_OUT = 48           # EfficientNet-B4 stem channels
BACKBONE_FEATS = 1000   # torchvision efficientnet_b4 output dim
NUM_CLASSES = 7         # stand-in for len(le.classes_)

# Padded (MXU / lane friendly) sizes
K_RAW = 3 * 3 * 3       # im2col K = Cin*kh*kw = 27
K_PAD = 32              # 27 -> 32
C_PAD = 128             # 48 -> 128 (lane-dense stem channels)
NC_PAD = 128            # 7 -> 128 (lane-dense classifier store)


def _round_up(x, m):
    return ((x + m - 1) // m) * m


# ----------------------------------------------------------------------------
# Fused Pallas kernel: stem matmul + SiLU + avg-pool + folded head/classifier
# ----------------------------------------------------------------------------

def _fused_stem_pool_head_kernel(
        patches_ref, stem_w_ref, stem_b_ref, comb_w_ref, comb_b_ref,
        out_ref, acc_ref, *, hw_valid, hw_pad, tile_m):
    t = pl.program_id(1)

    @pl.when(t == 0)
    def _init():
        acc_ref[...] = jnp.zeros_like(acc_ref)

    # stem conv as matmul (bf16 operands, f32 accumulate) + bias + SiLU
    x = patches_ref[0]                                       # (tile_m, K_PAD) bf16
    s = jnp.dot(x, stem_w_ref[...], preferred_element_type=jnp.float32)
    s = s + stem_b_ref[...]
    s = s * jax.nn.sigmoid(s)                                # SiLU in f32

    # per-sublane partial pool sums: pure VALU vreg adds; cross-sublane
    # reduce is deferred to the finalize step.
    acc_ref[...] += jnp.sum(s.reshape(tile_m // 8, 8, C_PAD), axis=0)

    @pl.when(t == pl.num_programs(1) - 1)
    def _finalize():
        pooled_sum = jnp.sum(acc_ref[...], axis=0, keepdims=True)  # (1, C_PAD)
        pad_rows = hw_pad - hw_valid
        if pad_rows:
            # zero-padded tail patch rows each contributed exactly silu(stem_b)
            sb = stem_b_ref[...]
            pooled_sum = pooled_sum - float(pad_rows) * (sb * jax.nn.sigmoid(sb))
        pooled = pooled_sum * (1.0 / float(hw_valid))              # (1, C_PAD)
        logits = jnp.dot(pooled.astype(jnp.bfloat16), comb_w_ref[...],
                         preferred_element_type=jnp.float32) + comb_b_ref[...]
        out_ref[...] = logits[None].astype(out_ref.dtype)          # (1, 1, NC_PAD)


def fused_forward_call(patches, stem_w, stem_b, comb_w, comb_b,
                       *, hw_valid, tile_m):
    B, hw_pad, _ = patches.shape
    n_tiles = hw_pad // tile_m

    flops = 2 * B * hw_pad * K_PAD * C_PAD + 2 * B * C_PAD * NC_PAD
    bytes_accessed = (patches.size * 2 + stem_w.size * 2 + comb_w.size * 2
                      + (stem_b.size + comb_b.size) * 4
                      + B * NC_PAD * 4)

    grid_spec = pltpu.PrefetchScalarGridSpec(
        num_scalar_prefetch=0,
        grid=(B, n_tiles),
        in_specs=[
            pl.BlockSpec((1, tile_m, K_PAD), lambda b, t: (b, t, 0)),  # patches
            pl.BlockSpec((K_PAD, C_PAD), lambda b, t: (0, 0)),         # stem_w
            pl.BlockSpec((1, C_PAD), lambda b, t: (0, 0)),             # stem_b
            pl.BlockSpec((C_PAD, NC_PAD), lambda b, t: (0, 0)),        # comb_w
            pl.BlockSpec((1, NC_PAD), lambda b, t: (0, 0)),            # comb_b
        ],
        out_specs=pl.BlockSpec((1, 1, NC_PAD), lambda b, t: (b, 0, 0)),
        scratch_shapes=[pltpu.VMEM((8, C_PAD), jnp.float32)],
    )

    out = pl.pallas_call(
        functools.partial(_fused_stem_pool_head_kernel,
                          hw_valid=hw_valid, hw_pad=hw_pad, tile_m=tile_m),
        out_shape=jax.ShapeDtypeStruct((B, 1, NC_PAD), jnp.float32),
        grid_spec=grid_spec,
        compiler_params=pltpu.CompilerParams(
            dimension_semantics=("parallel", "arbitrary"),
            vmem_limit_bytes=32 * 1024 * 1024,
        ),
        cost_estimate=pl.CostEstimate(
            flops=int(flops),
            transcendentals=int(B * hw_pad * C_PAD),
            bytes_accessed=int(bytes_accessed),
        ),
    )(patches, stem_w, stem_b, comb_w, comb_b)
    return out.reshape(B, NC_PAD)


# ----------------------------------------------------------------------------
# Model: parameters + one-time weight prep + forward
# ----------------------------------------------------------------------------

def init_params(key):
    k = jax.random.split(key, 6)
    scale = 0.05
    return {
        # stem conv: 3x3 stride 2, in=3, out=48 -> as (27, 48) matmul weight
        "stem_w": scale * jax.random.normal(k[0], (K_RAW, STEM_OUT), jnp.float32),
        "stem_b": scale * jax.random.normal(k[1], (STEM_OUT,), jnp.float32),
        # backbone head: pooled stem features -> 1000 logits
        "head_w": scale * jax.random.normal(k[2], (STEM_OUT, BACKBONE_FEATS), jnp.float32),
        "head_b": scale * jax.random.normal(k[3], (BACKBONE_FEATS,), jnp.float32),
        # classifier: nn.Linear(1000, num_classes)
        "cls_w": scale * jax.random.normal(k[4], (BACKBONE_FEATS, NUM_CLASSES), jnp.float32),
        "cls_b": scale * jax.random.normal(k[5], (BACKBONE_FEATS and NUM_CLASSES,), jnp.float32),
    }


def prepare_weights(p):
    """One-time (outside the inference hot path): pad to lane/MXU-friendly
    shapes, cast matmul operands to bf16, and fold head@classifier."""
    stem_w = jnp.zeros((K_PAD, C_PAD), jnp.bfloat16)
    stem_w = stem_w.at[:K_RAW, :STEM_OUT].set(p["stem_w"].astype(jnp.bfloat16))
    stem_b = jnp.zeros((1, C_PAD), jnp.float32).at[0, :STEM_OUT].set(p["stem_b"])

    # No nonlinearity between the backbone head and the classifier Linear, so
    # compose them in f32 and cast once to bf16.
    comb_w_f32 = p["head_w"] @ p["cls_w"]                  # (48, num_classes)
    comb_b_f32 = p["head_b"] @ p["cls_w"] + p["cls_b"]     # (num_classes,)

    comb_w = jnp.zeros((C_PAD, NC_PAD), jnp.bfloat16)
    comb_w = comb_w.at[:STEM_OUT, :NUM_CLASSES].set(comb_w_f32.astype(jnp.bfloat16))
    comb_b = jnp.zeros((1, NC_PAD), jnp.float32).at[0, :NUM_CLASSES].set(comb_b_f32)

    return {"stem_w": stem_w, "stem_b": stem_b,
            "comb_w": comb_w, "comb_b": comb_b}


@jax.jit
def forward(prepped, x_nchw):
    B, C, H, W = x_nchw.shape
    # channel-last once (tiny 3-channel tensor) so patches come out lane-dense
    x_nhwc = jnp.transpose(x_nchw, (0, 2, 3, 1))
    # NOTE: patch-feature ordering here must match the (27, 48) flattening of
    # stem_w; with random weights any consistent ordering is equivalent.
    patches = lax.conv_general_dilated_patches(
        x_nhwc, filter_shape=(3, 3), window_strides=(2, 2),
        padding=((1, 1), (1, 1)),
        dimension_numbers=("NHWC", "HWIO", "NHWC"))       # (B, Hp, Wp, 27)
    Hp, Wp, CK = patches.shape[1], patches.shape[2], patches.shape[3]
    HW = Hp * Wp

    # large spatial tiles to amortize per-grid-step overhead; multiple of 16
    # for bf16 sublane packing.
    tile_m = min(4096, _round_up(HW, 16))
    hw_pad = _round_up(HW, tile_m)

    patches = patches.reshape(B, HW, CK)
    patches = jnp.pad(patches, ((0, 0), (0, hw_pad - HW), (0, K_PAD - CK)))
    patches = patches.astype(jnp.bfloat16)

    logits_pad = fused_forward_call(
        patches, prepped["stem_w"], prepped["stem_b"],
        prepped["comb_w"], prepped["comb_b"],
        hw_valid=HW, tile_m=tile_m)                        # (B, NC_PAD)
    return logits_pad[:, :NUM_CLASSES]


if __name__ == "__main__":
    key = jax.random.PRNGKey(0)
    pk, xk = jax.random.split(key)
    params = init_params(pk)
    prepped = jax.tree_util.tree_map(jax.block_until_ready, prepare_weights(params))
    x = jax.random.normal(xk, (2, 3, 32, 32), jnp.float32)  # NCHW, like PyTorch

    out = forward(prepped, x)
    out = jax.block_until_ready(out)
    assert out.shape == (2, NUM_CLASSES), out.shape
    assert bool(jnp.all(jnp.isfinite(out)))
    print("KERNEL_OK")
</pallas_src>

<mosaic_0001>
module attributes {stable_mosaic.version = 11 : i64} {
  func.func @_fused_stem_pool_head_kernel(%arg0: i32, %arg1: i32, %arg2: memref<1x256x32xbf16, #tpu.memory_space<vmem>>, %arg3: memref<32x128xbf16, #tpu.memory_space<vmem>>, %arg4: memref<1x128xf32, #tpu.memory_space<vmem>>, %arg5: memref<128x128xbf16, #tpu.memory_space<vmem>>, %arg6: memref<1x128xf32, #tpu.memory_space<vmem>>, %arg7: memref<1x1x128xf32, #tpu.memory_space<vmem>>, %arg8: memref<8x128xf32, #tpu.memory_space<vmem>>) attributes {dimension_semantics = [#tpu.dimension_semantics<parallel>, #tpu.dimension_semantics<arbitrary>], iteration_bounds = array<i64: 2, 1>, scalar_prefetch = 0 : i64, scratch_operands = 1 : i64, tpu.core_type = #tpu.core_type<tc>, window_params = [{transform_indices = @transform_0, window_bounds = array<i64: 1, 256, 32>}, {pipeline_mode = #tpu.pipeline_mode<synchronous>, transform_indices = @transform_1, window_bounds = array<i64: 32, 128>}, {pipeline_mode = #tpu.pipeline_mode<synchronous>, transform_indices = @transform_2, window_bounds = array<i64: 1, 128>}, {pipeline_mode = #tpu.pipeline_mode<synchronous>, transform_indices = @transform_3, window_bounds = array<i64: 128, 128>}, {pipeline_mode = #tpu.pipeline_mode<synchronous>, transform_indices = @transform_4, window_bounds = array<i64: 1, 128>}, {transform_indices = @transform_5, window_bounds = array<i64: 1, 1, 128>}]} {
    %c0_i32 = arith.constant 0 : i32
    %0 = arith.cmpi eq, %arg1, %c0_i32 : i32
    %1 = arith.extui %0 : i1 to i32
    %c0_i32_0 = arith.constant 0 : i32
    %2 = arith.cmpi ne, %1, %c0_i32_0 : i32
    scf.if %2 {
      %cst_15 = arith.constant 0.000000e+00 : f32
      %24 = vector.broadcast %cst_15 : f32 to vector<8x128xf32>
      %c0_16 = arith.constant 0 : index
      %c0_17 = arith.constant 0 : index
      %25 = vector.load %arg8[%c0_16, %c0_17] : memref<8x128xf32, #tpu.memory_space<vmem>>, vector<8x128xf32>
      tpu.vector_store %arg8[%c0_16, %c0_17], %24 {strides = array<i32>} : memref<8x128xf32, #tpu.memory_space<vmem>>, vector<8x128xf32>,
    } else {
    }
    %c0 = arith.constant 0 : index
    %c0_1 = arith.constant 0 : index
    %c0_2 = arith.constant 0 : index
    %3 = vector.load %arg2[%c0, %c0_1, %c0_2] : memref<1x256x32xbf16, #tpu.memory_space<vmem>>, vector<1x256x32xbf16>
    %4 = vector.shape_cast %3 : vector<1x256x32xbf16> to vector<256x32xbf16>
    %c0_3 = arith.constant 0 : index
    %c0_4 = arith.constant 0 : index
    %5 = vector.load %arg3[%c0_3, %c0_4] : memref<32x128xbf16, #tpu.memory_space<vmem>>, vector<32x128xbf16>
    %cst = arith.constant dense<0.000000e+00> : vector<256x128xf32>
    %6 = tpu.matmul %4, %5, %cst {dimension_numbers = #tpu.dot_dimension_numbers<[1], [0], [0], [1], [0, 0, 1, 1], [], []>} : vector<256x32xbf16>, vector<32x128xbf16>, vector<256x128xf32> -> vector<256x128xf32>
    %c0_5 = arith.constant 0 : index
    %c0_6 = arith.constant 0 : index
    %7 = vector.load %arg4[%c0_5, %c0_6] : memref<1x128xf32, #tpu.memory_space<vmem>>, vector<1x128xf32>
    %8 = vector.broadcast %7 : vector<1x128xf32> to vector<256x128xf32>
    %9 = arith.addf %6, %8 : vector<256x128xf32>
    %10 = arith.negf %9 : vector<256x128xf32>
    %11 = math.exp %10 : vector<256x128xf32>
    %cst_7 = arith.constant 1.000000e+00 : f32
    %12 = vector.broadcast %cst_7 : f32 to vector<256x128xf32>
    %13 = arith.addf %12, %11 : vector<256x128xf32>
    %14 = arith.divf %12, %13 : vector<256x128xf32>
    %15 = arith.mulf %9, %14 : vector<256x128xf32>
    %c0_8 = arith.constant 0 : index
    %c0_9 = arith.constant 0 : index
    %16 = vector.load %arg8[%c0_8, %c0_9] : memref<8x128xf32, #tpu.memory_space<vmem>>, vector<8x128xf32>
    %17 = vector.shape_cast %15 : vector<256x128xf32> to vector<32x8x128xf32>
    %cst_10 = arith.constant dense<0.000000e+00> : vector<8x128xf32>
    %18 = vector.multi_reduction <add>, %17, %cst_10 [0] : vector<32x8x128xf32> to vector<8x128xf32>
    %19 = arith.addf %16, %18 : vector<8x128xf32>
    %c0_11 = arith.constant 0 : index
    %c0_12 = arith.constant 0 : index
    %20 = vector.load %arg8[%c0_11, %c0_12] : memref<8x128xf32, #tpu.memory_space<vmem>>, vector<8x128xf32>
    tpu.vector_store %arg8[%c0_11, %c0_12], %19 {strides = array<i32>} : memref<8x128xf32, #tpu.memory_space<vmem>>, vector<8x128xf32>,
    %c0_i32_13 = arith.constant 0 : i32
    %21 = arith.cmpi eq, %arg1, %c0_i32_13 : i32
    %22 = arith.extui %21 : i1 to i32
    %c0_i32_14 = arith.constant 0 : i32
    %23 = arith.cmpi ne, %22, %c0_i32_14 : i32
    scf.if %23 {
      %c0_15 = arith.constant 0 : index
      %c0_16 = arith.constant 0 : index
      %24 = vector.load %arg8[%c0_15, %c0_16] : memref<8x128xf32, #tpu.memory_space<vmem>>, vector<8x128xf32>
      %cst_17 = arith.constant dense<0.000000e+00> : vector<128xf32>
      %25 = vector.multi_reduction <add>, %24, %cst_17 [0] : vector<8x128xf32> to vector<128xf32>
      %26 = vector.shape_cast %25 : vector<128xf32> to vector<1x128xf32>
      %cst_18 = arith.constant 3.906250e-03 : f32
      %27 = vector.broadcast %cst_18 : f32 to vector<1x128xf32>
      %28 = arith.mulf %26, %27 : vector<1x128xf32>
      %29 = arith.truncf %28 : vector<1x128xf32> to vector<1x128xbf16>
      %c0_19 = arith.constant 0 : index
      %c0_20 = arith.constant 0 : index
      %30 = vector.load %arg5[%c0_19, %c0_20] : memref<128x128xbf16, #tpu.memory_space<vmem>>, vector<128x128xbf16>
      %cst_21 = arith.constant dense<0.000000e+00> : vector<1x128xf32>
      %31 = tpu.matmul %29, %30, %cst_21 {dimension_numbers = #tpu.dot_dimension_numbers<[1], [0], [0], [1], [0, 0, 1, 1], [], []>} : vector<1x128xbf16>, vector<128x128xbf16>, vector<1x128xf32> -> vector<1x128xf32>
      %c0_22 = arith.constant 0 : index
      %c0_23 = arith.constant 0 : index
      %32 = vector.load %arg6[%c0_22, %c0_23] : memref<1x128xf32, #tpu.memory_space<vmem>>, vector<1x128xf32>
      %33 = arith.addf %31, %32 : vector<1x128xf32>
      %34 = vector.shape_cast %33 : vector<1x128xf32> to vector<1x1x128xf32>
      %c0_24 = arith.constant 0 : index
      %c0_25 = arith.constant 0 : index
      %c0_26 = arith.constant 0 : index
      %35 = vector.load %arg7[%c0_24, %c0_25, %c0_26] : memref<1x1x128xf32, #tpu.memory_space<vmem>>, vector<1x1x128xf32>
      tpu.vector_store %arg7[%c0_24, %c0_25, %c0_26], %34 {strides = array<i32>} : memref<1x1x128xf32, #tpu.memory_space<vmem>>, vector<1x1x128xf32>,
    } else {
    }
    return
  }
  func.func @transform_0(%arg0: i32, %arg1: i32) -> (i32, i32, i32) {
    %c0_i32 = arith.constant 0 : i32
    %c0_i32_0 = arith.constant 0 : i32
    return %arg0, %arg1, %c0_i32 : i32, i32, i32
  }
  func.func @transform_1(%arg0: i32, %arg1: i32) -> (i32, i32) {
    %c0_i32 = arith.constant 0 : i32
    %c0_i32_0 = arith.constant 0 : i32
    %c0_i32_1 = arith.constant 0 : i32
    return %c0_i32, %c0_i32_0 : i32, i32
  }
  func.func @transform_2(%arg0: i32, %arg1: i32) -> (i32, i32) {
    %c0_i32 = arith.constant 0 : i32
    %c0_i32_0 = arith.constant 0 : i32
    %c0_i32_1 = arith.constant 0 : i32
    return %c0_i32, %c0_i32_0 : i32, i32
  }
  func.func @transform_3(%arg0: i32, %arg1: i32) -> (i32, i32) {
    %c0_i32 = arith.constant 0 : i32
    %c0_i32_0 = arith.constant 0 : i32
    %c0_i32_1 = arith.constant 0 : i32
    return %c0_i32, %c0_i32_0 : i32, i32
  }
  func.func @transform_4(%arg0: i32, %arg1: i32) -> (i32, i32) {
    %c0_i32 = arith.constant 0 : i32
    %c0_i32_0 = arith.constant 0 : i32
    %c0_i32_1 = arith.constant 0 : i32
    return %c0_i32, %c0_i32_0 : i32, i32
  }
  func.func @transform_5(%arg0: i32, %arg1: i32) -> (i32, i32, i32) {
    %c0_i32 = arith.constant 0 : i32
    %c0_i32_0 = arith.constant 0 : i32
    %c0_i32_1 = arith.constant 0 : i32
    return %arg0, %c0_i32, %c0_i32_0 : i32, i32, i32
  }
}

</mosaic_0001>

<llo_original>
// kernel: forward.1
$region0: #{forward.1}
  #allocation0 [shape = 'u32[]', space=smem, size = 0x4, offset = 0x4, fixed_abs, tag = 'smem constant byte address 0x4 - core index']
  #allocation1 [shape = 'u32[144,128]{1,0:T(1,128)}', space=vmem, size = 0x12000, scoped, tag = 'internal scratch']
  #allocation2 [shape = 'f32[8,128]{1,0:T(8,128)}', space=vmem, size = 0x1000, scoped, tag = 'scratch operand']
  %s0 = inlined_call_operand.vmem [shape: bf16[2,256,32], index: 0, kind: input, shape index: {}]
  %s1 = inlined_call_operand.vmem [shape: bf16[32,128], index: 1, kind: input, shape index: {}]
  %s2 = inlined_call_operand.vmem [shape: f32[1,128], index: 2, kind: input, shape index: {}]
  %s3 = inlined_call_operand.vmem [shape: bf16[128,128], index: 3, kind: input, shape index: {}]
  %s4 = inlined_call_operand.vmem [shape: f32[1,128], index: 4, kind: input, shape index: {}]
  %s5 = inlined_call_operand.hbm [shape: f32[2,1,128], index: 5, kind: output, shape index: {}]
  %s6 = sld [smem:[#allocation0]]
  $region61: #{forward.1} parent=0
    _
  %s8 = ssub.s32 1, %s6
  %s9 = scalar_select 0, %s8, %s6
  $region1: #{forward.1} parent=0
    #allocation3 [shape = 'u8[1024]{0}', space=vmem, size = 0x400, scoped, tag = 'output window, operand 0']
    #allocation4 [shape = 's32[2]{0}', space=sflag, size = 0x8, scoped, tag = 'scoped memory for forward.1']
    %10 = vsyncpa [#allocation4], 0
    %s11 = scalar_lea.sflag [#allocation4], 1
    %12 = vsyncpa %s11, 0
    loop: start=0, step=1, limit=4
    $region2: #{forward.1} parent=1 // loop_pre_header
      _
    $region3: #{forward.1} parent=1 // loop_header
      %s14 = sphi 0, %s18
      %p15 = scmp.ge.s32.totalorder %s14, 4
      %s21 = sphi 0, %s33
      %s22 = sphi 0, %s29
      %s23 = sphi 0, %s21
      %s24 = sphi 0, %s22
      %s25 = sphi 0, %s23
      %s26 = sphi 0, %s24
      %s38 = sphi 0, %s40
      %s41 = sphi 0, %s38
      %s42 = sphi 0, %s41
      %s58 = sphi 0, %s42
      %s62 = sphi 0, %s62
      %s64 = sphi 0, %s62
      %s65 = sphi 0, %s64
      %s79 = sphi 0, %s65
      %s83 = sphi 0, %s83
      %s85 = sphi 0, %s83
      %s86 = sphi 0, %s85
      %s100 = sphi 0, %s86
      %s104 = sphi 0, %s104
      %s106 = sphi 0, %s104
      %s107 = sphi 0, %s106
      %s121 = sphi 0, %s107
      %s125 = sphi 0, %s125
      %s127 = sphi 0, %s125
      %s128 = sphi 0, %s127
      %s142 = sphi 0, %s128
      %s148 = sphi 0, %s150
      %s151 = sphi 0, %s148
      %s152 = sphi 0, %s151
      %s168 = sphi 0, %s152
    $region4: #{forward.1} parent=1 // loop_header_branch
      %17 = sbr.rel (%p15) target = $region8
    $region5: #{forward.1} parent=1 // loop_body
      %s19 = ssub.s32 %s14, 1
      %s20 = ssub.s32 %s14, 2
      %s27 = sadd.s32 1, %s22
      %p28 = scmp.ge.s32.totalorder %s27, 1
      %s29 = scalar_select %p28, 0, %s27
      %s30 = sadd.s32 1, %s21
      %s31 = scalar_select %p28, %s30, %s21
      %p32 = scmp.ge.s32.totalorder %s31, 2
      %s33 = scalar_select %p32, 0, %s31
      %s34 = ssub.s32 %s21, %s33
      %s35 = ssub.s32 %s22, %s29
      %s36 = sor.u32 %s34, %s35
      %p37 = scmp.eq.s32.totalorder %s36, 0
      %s39 = sadd.s32 %s38, 1
      %s40 = scalar_select %p37, %s38, %s39
      %p43 = pneg %p37
      %p44 = scmp.eq.s32.totalorder %s14, 1
      %p45 = por %p43, %p44
      %p46 = scmp.ne.s32.totalorder %s38, %s41
      %p47 = scmp.eq.s32.totalorder %s14, 0
      %p48 = por %p46, %p47
      %p49 = scmp.ne.s32.totalorder %s38, %s41
      %p50 = scmp.eq.s32.totalorder %s19, 1
      %p51 = por %p49, %p50
      %p52 = scmp.ne.s32.totalorder %s41, %s42
      %p53 = scmp.eq.s32.totalorder %s19, 0
      %p54 = por %p52, %p53
      %p55 = scmp.ne.s32.totalorder %s41, %s42
      %p56 = scmp.eq.s32.totalorder %s20, 1
      %p57 = por %p55, %p56
      %p59 = scmp.ne.s32.totalorder %s42, %s58
      %p60 = scmp.eq.s32.totalorder %s20, 0
      %p61 = por %p59, %p60
      %s63 = sadd.s32 %s62, 1
      %p66 = scmp.eq.s32.totalorder %s14, 1
      %p67 = scmp.ne.s32.totalorder %s62, %s64
      %p68 = scmp.eq.s32.totalorder %s14, 0
      %p69 = por %p67, %p68
      %p70 = scmp.ne.s32.totalorder %s62, %s64
      %p71 = scmp.eq.s32.totalorder %s19, 1
      %p72 = por %p70, %p71
      %p73 = scmp.ne.s32.totalorder %s64, %s65
      %p74 = scmp.eq.s32.totalorder %s19, 0
      %p75 = por %p73, %p74
      %p76 = scmp.ne.s32.totalorder %s64, %s65
      %p77 = scmp.eq.s32.totalorder %s20, 1
      %p78 = por %p76, %p77
      %p80 = scmp.ne.s32.totalorder %s65, %s79
      %p81 = scmp.eq.s32.totalorder %s20, 0
      %p82 = por %p80, %p81
      %s84 = sadd.s32 %s83, 1
      %p87 = scmp.eq.s32.totalorder %s14, 1
      %p88 = scmp.ne.s32.totalorder %s83, %s85
      %p89 = scmp.eq.s32.totalorder %s14, 0
      %p90 = por %p88, %p89
      %p91 = scmp.ne.s32.totalorder %s83, %s85
      %p92 = scmp.eq.s32.totalorder %s19, 1
      %p93 = por %p91, %p92
      %p94 = scmp.ne.s32.totalorder %s85, %s86
      %p95 = scmp.eq.s32.totalorder %s19, 0
      %p96 = por %p94, %p95
      %p97 = scmp.ne.s32.totalorder %s85, %s86
      %p98 = scmp.eq.s32.totalorder %s20, 1
      %p99 = por %p97, %p98
      %p101 = scmp.ne.s32.totalorder %s86, %s100
      %p102 = scmp.eq.s32.totalorder %s20, 0
      %p103 = por %p101, %p102
      %s105 = sadd.s32 %s104, 1
      %p108 = scmp.eq.s32.totalorder %s14, 1
      %p109 = scmp.ne.s32.totalorder %s104, %s106
      %p110 = scmp.eq.s32.totalorder %s14, 0
      %p111 = por %p109, %p110
      %p112 = scmp.ne.s32.totalorder %s104, %s106
      %p113 = scmp.eq.s32.totalorder %s19, 1
      %p114 = por %p112, %p113
      %p115 = scmp.ne.s32.totalorder %s106, %s107
      %p116 = scmp.eq.s32.totalorder %s19, 0
      %p117 = por %p115, %p116
      %p118 = scmp.ne.s32.totalorder %s106, %s107
      %p119 = scmp.eq.s32.totalorder %s20, 1
      %p120 = por %p118, %p119
      %p122 = scmp.ne.s32.totalorder %s107, %s121
      %p123 = scmp.eq.s32.totalorder %s20, 0
      %p124 = por %p122, %p123
      %s126 = sadd.s32 %s125, 1
      %p129 = scmp.eq.s32.totalorder %s14, 1
      %p130 = scmp.ne.s32.totalorder %s125, %s127
      %p131 = scmp.eq.s32.totalorder %s14, 0
      %p132 = por %p130, %p131
      %p133 = scmp.ne.s32.totalorder %s125, %s127
      %p134 = scmp.eq.s32.totalorder %s19, 1
      %p135 = por %p133, %p134
      %p136 = scmp.ne.s32.totalorder %s127, %s128
      %p137 = scmp.eq.s32.totalorder %s19, 0
      %p138 = por %p136, %p137
      %p139 = scmp.ne.s32.totalorder %s127, %s128
      %p140 = scmp.eq.s32.totalorder %s20, 1
      %p141 = por %p139, %p140
      %p143 = scmp.ne.s32.totalorder %s128, %s142
      %p144 = scmp.eq.s32.totalorder %s20, 0
      %p145 = por %p143, %p144
      %s146 = ssub.s32 %s21, %s33
      %p147 = scmp.eq.s32.totalorder %s146, 0
      %s149 = sadd.s32 %s148, 1
      %s150 = scalar_select %p147, %s148, %s149
      %p153 = pneg %p147
      %p154 = scmp.eq.s32.totalorder %s14, 1
      %p155 = por %p153, %p154
      %p156 = scmp.ne.s32.totalorder %s148, %s151
      %p157 = scmp.eq.s32.totalorder %s14, 0
      %p158 = por %p156, %p157
      %p159 = scmp.ne.s32.totalorder %s148, %s151
      %p160 = scmp.eq.s32.totalorder %s19, 1
      %p161 = por %p159, %p160
      %p162 = scmp.ne.s32.totalorder %s151, %s152
      %p163 = scmp.eq.s32.totalorder %s19, 0
      %p164 = por %p162, %p163
      %p165 = scmp.ne.s32.totalorder %s151, %s152
      %p166 = scmp.eq.s32.totalorder %s20, 1
      %p167 = por %p165, %p166
      %p169 = scmp.ne.s32.totalorder %s152, %s168
      %p170 = scmp.eq.s32.totalorder %s20, 0
      %p171 = por %p169, %p170
      %p172 = scmp.le.s32.totalorder 1, %s14
      %p173 = scmp.lt.s32.totalorder %s14, 3
      %p174 = pnand %p172, %p173
      %p175 = pneg %p174
      // Predicated region
      $region9: #{forward.1} parent=5 // pred_check
        _
      $region10: #{forward.1} parent=5 // pred_check_branch
        %177 = sbr.rel (%p174) target = $region12
      $region11: #{forward.1} parent=5 // pred_region
        %s178 = ssub.s32 %s14, 1
        // Predicated region
        $region13: #{forward.1} parent=11 // pred_check
          %p179 = pneg %p75
        $region14: #{forward.1} parent=11 // pred_check_branch
          %181 = sbr.rel (%p179) target = $region16
        $region15: #{forward.1} parent=11 // pred_region
          _
        $region16: #{forward.1} parent=11 // pred_fallthru
          _
        // Predicated region
        $region17: #{forward.1} parent=11 // pred_check
          %p182 = pneg %p96
        $region18: #{forward.1} parent=11 // pred_check_branch
          %184 = sbr.rel (%p182) target = $region20
        $region19: #{forward.1} parent=11 // pred_region
          _
        $region20: #{forward.1} parent=11 // pred_fallthru
          _
        // Predicated region
        $region21: #{forward.1} parent=11 // pred_check
          %p185 = pneg %p117
        $region22: #{forward.1} parent=11 // pred_check_branch
          %187 = sbr.rel (%p185) target = $region24
        $region23: #{forward.1} parent=11 // pred_region
          _
        $region24: #{forward.1} parent=11 // pred_fallthru
          _
        // Predicated region
        $region25: #{forward.1} parent=11 // pred_check
          %p188 = pneg %p138
        $region26: #{forward.1} parent=11 // pred_check_branch
          %190 = sbr.rel (%p188) target = $region28
        $region27: #{forward.1} parent=11 // pred_region
          _
        $region28: #{forward.1} parent=11 // pred_fallthru
          _
      $region12: #{forward.1} parent=5 // pred_fallthru
        _
      %p191 = scmp.lt.s32.totalorder %s14, 2
      // Predicated region
      $region29: #{forward.1} parent=5 // pred_check
        %p192 = pneg %p191
      $region30: #{forward.1} parent=5 // pred_check_branch
        %194 = sbr.rel (%p192) target = $region32
      $region31: #{forward.1} parent=5 // pred_region
        // Predicated region
        $region33: #{forward.1} parent=31 // pred_check
          %p195 = pneg %p48
        $region34: #{forward.1} parent=31 // pred_check_branch
          %197 = sbr.rel (%p195) target = $region36
        $region35: #{forward.1} parent=31 // pred_region
          %s198 = smul.u32 32, %s22
          %p199 = scmp.lt.s32.totalorder %s21, 1
          %s200 = scalar_select %p199, %s21, 1
          %p201 = scmp.lt.s32.totalorder %s198, 31
          %s202 = scalar_select %p201, %s198, 31
          %s203 = smul.addr %s200, 32
          %s204 = sadd.s32 %s202, %s203
          %s205 = smul.addr %s204, 4
          %s206 = scalar_lea.vmem %s0, %s205
          %s207 = smul.u32 32, %s22
        $region36: #{forward.1} parent=31 // pred_fallthru
          _
      $region32: #{forward.1} parent=5 // pred_fallthru
        _
      %p208 = scmp.le.s32.totalorder 1, %s14
      %p209 = scmp.lt.s32.totalorder %s14, 3
      %p210 = pnand %p208, %p209
      %p211 = pneg %p210
      // Predicated region
      $region37: #{forward.1} parent=5 // pred_check
        _
      $region38: #{forward.1} parent=5 // pred_check_branch
        %213 = sbr.rel (%p210) target = $region40
      $region39: #{forward.1} parent=5 // pred_region
        %s214 = ssub.s32 %s14, 1
        %s215 = smul.u32 32, %s24
        %p216 = scmp.lt.s32.totalorder %s23, 1
        %s217 = scalar_select %p216, %s23, 1
        %p218 = scmp.lt.s32.totalorder %s215, 31
        %s219 = scalar_select %p218, %s215, 31
        %s220 = smul.addr %s217, 32
        %s221 = sadd.s32 %s219, %s220
        %s222 = smul.addr %s221, 4
        %s223 = scalar_lea.vmem %s0, %s222
        %p224 = pneg %p54
        %p225 = pneg %p51
        %p226 = pneg %p75
        %p227 = pneg %p72
        %p228 = pneg %p96
        %p229 = pneg %p93
        %p230 = pneg %p117
        %p231 = pneg %p114
        %p232 = pneg %p138
        %p233 = pneg %p135
        %p234 = pneg %p164
        %p235 = pneg %p161
        %s236 = sand.u32 %s151, 1
        %s237 = scalar_lea.sflag [#allocation4], %s236
        %s238 = sand.u32 %s151, 1
        %s239 = scalar_lea.vmem [#allocation3], %s238
        %s240 = smul.u32 32, %s24
        %p241 = scmp.lt.s32.totalorder %s23, 1
        %s242 = scalar_select %p241, %s23, 1
        %p243 = scmp.lt.s32.totalorder %s240, 31
        %s244 = scalar_select %p243, %s240, 31
        %s245 = smul.addr %s242, 32
        %s246 = sadd.s32 %s244, %s245
        %s247 = smul.addr %s246, 4
        %s248 = scalar_lea.vmem %s0, %s247
        %s249 = smul.u32 32, %s24
        %p251 = scmp.eq.s32.totalorder %s24, 0
        // Predicated region
        $region41: #{forward.1} parent=39 // pred_check
          %p252 = pneg %p251
        $region42: #{forward.1} parent=39 // pred_check_branch
          %254 = sbr.rel (%p252) target = $region44
        $region43: #{forward.1} parent=39 // pred_region
          %255 = vst [vmem:[#allocation2] sm:$0xff] 0.0
        $region44: #{forward.1} parent=39 // pred_fallthru
          _
        %v256 = vld [vmem:[%s248] sm:$0xf]
        %v257 = vld [vmem:[%s248 + $0x4] sm:$0xf]
        %v258 = vld [vmem:[%s248 + $0x8] sm:$0xf]
        %v259 = vld [vmem:[%s248 + $0xc] sm:$0xf]
        %v260 = vld [vmem:[%s248 + $0x10] sm:$0xf]
        %v261 = vld [vmem:[%s248 + $0x14] sm:$0xf]
        %v262 = vld [vmem:[%s248 + $0x18] sm:$0xf]
        %v263 = vld [vmem:[%s248 + $0x1c] sm:$0xf]
        %v264 = vld [vmem:[%s248 + $0x20] sm:$0xf]
        %v265 = vld [vmem:[%s248 + $0x24] sm:$0xf]
        %v266 = vld [vmem:[%s248 + $0x28] sm:$0xf]
        %v267 = vld [vmem:[%s248 + $0x2c] sm:$0xf]
        %v268 = vld [vmem:[%s248 + $0x30] sm:$0xf]
        %v269 = vld [vmem:[%s248 + $0x34] sm:$0xf]
        %v270 = vld [vmem:[%s248 + $0x38] sm:$0xf]
        %v271 = vld [vmem:[%s248 + $0x3c] sm:$0xf]
        %v272 = vld [vmem:[%s248 + $0x40] sm:$0xf]
        %v273 = vld [vmem:[%s248 + $0x44] sm:$0xf]
        %v274 = vld [vmem:[%s248 + $0x48] sm:$0xf]
        %v275 = vld [vmem:[%s248 + $0x4c] sm:$0xf]
        %v276 = vld [vmem:[%s248 + $0x50] sm:$0xf]
        %v277 = vld [vmem:[%s248 + $0x54] sm:$0xf]
        %v278 = vld [vmem:[%s248 + $0x58] sm:$0xf]
        %v279 = vld [vmem:[%s248 + $0x5c] sm:$0xf]
        %v280 = vld [vmem:[%s248 + $0x60] sm:$0xf]
        %v281 = vld [vmem:[%s248 + $0x64] sm:$0xf]
        %v282 = vld [vmem:[%s248 + $0x68] sm:$0xf]
        %v283 = vld [vmem:[%s248 + $0x6c] sm:$0xf]
        %v284 = vld [vmem:[%s248 + $0x70] sm:$0xf]
        %v285 = vld [vmem:[%s248 + $0x74] sm:$0xf]
        %v286 = vld [vmem:[%s248 + $0x78] sm:$0xf]
        %v287 = vld [vmem:[%s248 + $0x7c] sm:$0xf]
        %v288 = vld [vmem:[%s1] sm:$0xf]
        %v289 = vld [vmem:[%s1 + $0x4] sm:$0xf]
        %v290 = vld [vmem:[%s1 + $0x8] sm:$0xf]
        %v291 = vld [vmem:[%s1 + $0xc] sm:$0xf]
        %v292 = vld [vmem:[%s2] sm:$0x1]
        %v294 = vlaneseq
        %v295 = vshrl.u32 %v294, 7
        %v296 = vsub.s32 0, %v295
        %v297 = vrot.slane %v292, %v296
        %v331 = vunpack.c.l.b16 %v256
        %v332 = vunpack.c.l.b16 %v257
        %v333 = vunpack.c.l.b16 %v258
        %v334 = vunpack.c.l.b16 %v259
        %v335 = vunpack.c.l.b16 %v260
        %v336 = vunpack.c.l.b16 %v261
        %v337 = vunpack.c.l.b16 %v262
        %v338 = vunpack.c.l.b16 %v263
        %v339 = vunpack.c.l.b16 %v264
        %v340 = vunpack.c.l.b16 %v265
        %v341 = vunpack.c.l.b16 %v266
        %v342 = vunpack.c.l.b16 %v267
        %v343 = vunpack.c.l.b16 %v268
        %v344 = vunpack.c.l.b16 %v269
        %v345 = vunpack.c.l.b16 %v270
        %v346 = vunpack.c.l.b16 %v271
        %v347 = vunpack.c.l.b16 %v272
        %v348 = vunpack.c.l.b16 %v273
        %v349 = vunpack.c.l.b16 %v274
        %v350 = vunpack.c.l.b16 %v275
        %v351 = vunpack.c.l.b16 %v276
        %v352 = vunpack.c.l.b16 %v277
        %v353 = vunpack.c.l.b16 %v278
        %v354 = vunpack.c.l.b16 %v279
        %v355 = vunpack.c.l.b16 %v280
        %v356 = vunpack.c.l.b16 %v281
        %v357 = vunpack.c.l.b16 %v282
        %v358 = vunpack.c.l.b16 %v283
        %v359 = vunpack.c.l.b16 %v284
        %v360 = vunpack.c.l.b16 %v285
        %v361 = vunpack.c.l.b16 %v286
        %v362 = vunpack.c.l.b16 %v287
        %v363 = vpack.c.b16 %v332, %v331
        %v364 = vpack.c.b16 %v334, %v333
        %v365 = vpack.c.b16 %v336, %v335
        %v366 = vpack.c.b16 %v338, %v337
        %v367 = vpack.c.b16 %v340, %v339
        %v368 = vpack.c.b16 %v342, %v341
        %v369 = vpack.c.b16 %v344, %v343
        %v370 = vpack.c.b16 %v346, %v345
        %v371 = vpack.c.b16 %v348, %v347
        %v372 = vpack.c.b16 %v350, %v349
        %v373 = vpack.c.b16 %v352, %v351
        %v374 = vpack.c.b16 %v354, %v353
        %v375 = vpack.c.b16 %v356, %v355
        %v376 = vpack.c.b16 %v358, %v357
        %v377 = vpack.c.b16 %v360, %v359
        %v378 = vpack.c.b16 %v362, %v361
        %v383 = vunpack.c.l.b16 %v288
        %v384 = vunpack.c.l.b16 %v289
        %v385 = vunpack.c.l.b16 %v290
        %v386 = vunpack.c.l.b16 %v291
        %v387 = vpack.c.b16 %v384, %v383
        %v388 = vpack.c.b16 %v386, %v385
        %vm391 = vcmask 261120
        %v393 = vsel %vm391, %v363, 0
        %v396 = vsel %vm391, %v364, 0
        %v399 = vsel %vm391, %v365, 0
        %v402 = vsel %vm391, %v366, 0
        %v405 = vsel %vm391, %v367, 0
        %v408 = vsel %vm391, %v368, 0
        %v411 = vsel %vm391, %v369, 0
        %v414 = vsel %vm391, %v370, 0
        %v417 = vsel %vm391, %v371, 0
        %v420 = vsel %vm391, %v372, 0
        %v423 = vsel %vm391, %v373, 0
        %v426 = vsel %vm391, %v374, 0
        %v429 = vsel %vm391, %v375, 0
        %v432 = vsel %vm391, %v376, 0
        %v435 = vsel %vm391, %v377, 0
        %v438 = vsel %vm391, %v378, 0
        %440 = vmatprep.subr.bf16.mxu0 0
        %441 = vmatpush1.bf16.msra.mxu0 %v387
        %442 = vmatprep.subr.bf16.mxu0 0
        %443 = vmatpush1.bf16.msra.mxu0 %v388
        %444 = vmatprep.subr.bf16.mxu0 0
        %445 = vmatpush1.bf16.msra.mxu0 0
        %446 = vmatprep.subr.bf16.mxu0 0
        %447 = vmatpush1.bf16.msra.mxu0 0
        %448 = vmatprep.subr.bf16.mxu0 0
        %449 = vmatpush1.bf16.msra.mxu0 0
        %450 = vmatprep.subr.bf16.mxu0 0
        %451 = vmatpush1.bf16.msra.mxu0 0
        %452 = vmatprep.subr.bf16.mxu0 0
        %453 = vmatpush1.bf16.msra.mxu0 0
        %454 = vmatprep.subr.bf16.mxu0 0
        %455 = vmatpush1.bf16.msra.mxu0 0
        %456 = vmatprep.subr.bf16.mxu0 0
        %457 = vmatpush1.bf16.msra.mxu0 0
        %458 = vmatprep.subr.bf16.mxu0 0
        %459 = vmatpush1.bf16.msra.mxu0 0
        %460 = vmatprep.subr.bf16.mxu0 0
        %461 = vmatpush1.bf16.msra.mxu0 0
        %462 = vmatprep.subr.bf16.mxu0 0
        %463 = vmatpush1.bf16.msra.mxu0 0
        %464 = vmatprep.subr.bf16.mxu0 0
        %465 = vmatpush1.bf16.msra.mxu0 0
        %466 = vmatprep.subr.bf16.mxu0 0
        %467 = vmatpush1.bf16.msra.mxu0 0
        %468 = vmatprep.subr.bf16.mxu0 0
        %469 = vmatpush1.bf16.msra.mxu0 0
        %470 = vmatprep.subr.bf16.mxu0 0
        %471 = vmatpush1.bf16.msra.mxu0 0
        %472 = vmatprep.mubr.bf16.mxu0 0
        %473 = vmatmul.mubr.bf16.gmra.mrb[0].mxu0 %v393
        %v474 = vpop.f32.mrb[0].mxu0
        %v475 = vadd.f32 %v297, %v474
        %v476 = vpop.f32.mrb[0].mxu0
        %v477 = vpop.f32.mrb[0].mxu0
        %v478 = vadd.f32 %v297, %v477
        %v479 = vpop.f32.mrb[0].mxu0
        %480 = vmatprep.mubr.bf16.mxu0 0
        %481 = vmatmul.mubr.bf16.gmra.mrb[0].mxu0 %v396
        %v482 = vpop.f32.mrb[0].mxu0
        %v483 = vadd.f32 %v297, %v482
        %v484 = vpop.f32.mrb[0].mxu0
        %v485 = vpop.f32.mrb[0].mxu0
        %v486 = vadd.f32 %v297, %v485
        %v487 = vpop.f32.mrb[0].mxu0
        %488 = vmatprep.mubr.bf16.mxu0 0
        %489 = vmatmul.mubr.bf16.gmra.mrb[0].mxu0 %v399
        %v490 = vpop.f32.mrb[0].mxu0
        %v491 = vadd.f32 %v297, %v490
        %v492 = vpop.f32.mrb[0].mxu0
        %v493 = vpop.f32.mrb[0].mxu0
        %v494 = vadd.f32 %v297, %v493
        %v495 = vpop.f32.mrb[0].mxu0
        %496 = vmatprep.mubr.bf16.mxu0 0
        %497 = vmatmul.mubr.bf16.gmra.mrb[0].mxu0 %v402
        %v498 = vpop.f32.mrb[0].mxu0
        %v499 = vadd.f32 %v297, %v498
        %v500 = vpop.f32.mrb[0].mxu0
        %v501 = vpop.f32.mrb[0].mxu0
        %v502 = vadd.f32 %v297, %v501
        %v503 = vpop.f32.mrb[0].mxu0
        %504 = vmatprep.mubr.bf16.mxu0 0
        %505 = vmatmul.mubr.bf16.gmra.mrb[0].mxu0 %v405
        %v506 = vpop.f32.mrb[0].mxu0
        %v507 = vadd.f32 %v297, %v506
        %v508 = vpop.f32.mrb[0].mxu0
        %v509 = vpop.f32.mrb[0].mxu0
        %v510 = vadd.f32 %v297, %v509
        %v511 = vpop.f32.mrb[0].mxu0
        %512 = vmatprep.mubr.bf16.mxu0 0
        %513 = vmatmul.mubr.bf16.gmra.mrb[0].mxu0 %v408
        %v514 = vpop.f32.mrb[0].mxu0
        %v515 = vadd.f32 %v297, %v514
        %v516 = vpop.f32.mrb[0].mxu0
        %v517 = vpop.f32.mrb[0].mxu0
        %v518 = vadd.f32 %v297, %v517
        %v519 = vpop.f32.mrb[0].mxu0
        %520 = vmatprep.mubr.bf16.mxu0 0
        %521 = vmatmul.mubr.bf16.gmra.mrb[0].mxu0 %v411
        %v522 = vpop.f32.mrb[0].mxu0
        %v523 = vadd.f32 %v297, %v522
        %v524 = vpop.f32.mrb[0].mxu0
        %v525 = vpop.f32.mrb[0].mxu0
        %v526 = vadd.f32 %v297, %v525
        %v527 = vpop.f32.mrb[0].mxu0
        %528 = vmatprep.mubr.bf16.mxu0 0
        %529 = vmatmul.mubr.bf16.gmra.mrb[0].mxu0 %v414
        %v530 = vpop.f32.mrb[0].mxu0
        %v531 = vadd.f32 %v297, %v530
        %v532 = vpop.f32.mrb[0].mxu0
        %v533 = vpop.f32.mrb[0].mxu0
        %v534 = vadd.f32 %v297, %v533
        %v535 = vpop.f32.mrb[0].mxu0
        %536 = vmatprep.mubr.bf16.mxu0 0
        %537 = vmatmul.mubr.bf16.gmra.mrb[0].mxu0 %v417
        %v538 = vpop.f32.mrb[0].mxu0
        %v539 = vadd.f32 %v297, %v538
        %v540 = vpop.f32.mrb[0].mxu0
        %v541 = vpop.f32.mrb[0].mxu0
        %v542 = vadd.f32 %v297, %v541
        %v543 = vpop.f32.mrb[0].mxu0
        %544 = vmatprep.mubr.bf16.mxu0 0
        %545 = vmatmul.mubr.bf16.gmra.mrb[0].mxu0 %v420
        %v546 = vpop.f32.mrb[0].mxu0
        %v547 = vadd.f32 %v297, %v546
        %v548 = vpop.f32.mrb[0].mxu0
        %v549 = vpop.f32.mrb[0].mxu0
        %v550 = vadd.f32 %v297, %v549
        %v551 = vpop.f32.mrb[0].mxu0
        %552 = vmatprep.mubr.bf16.mxu0 0
        %553 = vmatmul.mubr.bf16.gmra.mrb[0].mxu0 %v423
        %v554 = vpop.f32.mrb[0].mxu0
        %v555 = vadd.f32 %v297, %v554
        %v556 = vpop.f32.mrb[0].mxu0
        %v557 = vpop.f32.mrb[0].mxu0
        %v558 = vadd.f32 %v297, %v557
        %v559 = vpop.f32.mrb[0].mxu0
        %560 = vmatprep.mubr.bf16.mxu0 0
        %561 = vmatmul.mubr.bf16.gmra.mrb[0].mxu0 %v426
        %v562 = vpop.f32.mrb[0].mxu0
        %v563 = vadd.f32 %v297, %v562
        %v564 = vpop.f32.mrb[0].mxu0
        %v565 = vpop.f32.mrb[0].mxu0
        %v566 = vadd.f32 %v297, %v565
        %v567 = vpop.f32.mrb[0].mxu0
        %568 = vmatprep.mubr.bf16.mxu0 0
        %569 = vmatmul.mubr.bf16.gmra.mrb[0].mxu0 %v429
        %v570 = vpop.f32.mrb[0].mxu0
        %v571 = vadd.f32 %v297, %v570
        %v572 = vpop.f32.mrb[0].mxu0
        %v573 = vpop.f32.mrb[0].mxu0
        %v574 = vadd.f32 %v297, %v573
        %v575 = vpop.f32.mrb[0].mxu0
        %576 = vmatprep.mubr.bf16.mxu0 0
        %577 = vmatmul.mubr.bf16.gmra.mrb[0].mxu0 %v432
        %v578 = vpop.f32.mrb[0].mxu0
        %v579 = vadd.f32 %v297, %v578
        %v580 = vpop.f32.mrb[0].mxu0
        %v581 = vpop.f32.mrb[0].mxu0
        %v582 = vadd.f32 %v297, %v581
        %v583 = vpop.f32.mrb[0].mxu0
        %584 = vmatprep.mubr.bf16.mxu0 0
        %585 = vmatmul.mubr.bf16.gmra.mrb[0].mxu0 %v435
        %v586 = vpop.f32.mrb[0].mxu0
        %v587 = vadd.f32 %v297, %v586
        %v588 = vpop.f32.mrb[0].mxu0
        %v589 = vpop.f32.mrb[0].mxu0
        %v590 = vadd.f32 %v297, %v589
        %v591 = vpop.f32.mrb[0].mxu0
        %592 = vmatprep.mubr.bf16.mxu0 0
        %593 = vmatmul.mubr.bf16.gmra.mrb[0].mxu0 %v438
        %v594 = vpop.f32.mrb[0].mxu0
        %v595 = vadd.f32 %v297, %v594
        %v596 = vpop.f32.mrb[0].mxu0
        %v597 = vpop.f32.mrb[0].mxu0
        %v598 = vadd.f32 %v297, %v597
        %v599 = vpop.f32.mrb[0].mxu0
        %600 = vdwg.mxu0
        %v601 = vxor.u32 %v475, 2147483648
        %v602 = vxor.u32 %v478, 2147483648
        %v603 = vxor.u32 %v483, 2147483648
        %v604 = vxor.u32 %v486, 2147483648
        %v605 = vxor.u32 %v491, 2147483648
        %v606 = vxor.u32 %v494, 2147483648
        %v607 = vxor.u32 %v499, 2147483648
        %v608 = vxor.u32 %v502, 2147483648
        %v609 = vxor.u32 %v507, 2147483648
        %v610 = vxor.u32 %v510, 2147483648
        %v611 = vxor.u32 %v515, 2147483648
        %v612 = vxor.u32 %v518, 2147483648
        %v613 = vxor.u32 %v523, 2147483648
        %v614 = vxor.u32 %v526, 2147483648
        %v615 = vxor.u32 %v531, 2147483648
        %v616 = vxor.u32 %v534, 2147483648
        %v617 = vxor.u32 %v539, 2147483648
        %v618 = vxor.u32 %v542, 2147483648
        %v619 = vxor.u32 %v547, 2147483648
        %v620 = vxor.u32 %v550, 2147483648
        %v621 = vxor.u32 %v555, 2147483648
        %v622 = vxor.u32 %v558, 2147483648
        %v623 = vxor.u32 %v563, 2147483648
        %v624 = vxor.u32 %v566, 2147483648
        %v625 = vxor.u32 %v571, 2147483648
        %v626 = vxor.u32 %v574, 2147483648
        %v627 = vxor.u32 %v579, 2147483648
        %v628 = vxor.u32 %v582, 2147483648
        %v629 = vxor.u32 %v587, 2147483648
        %v630 = vxor.u32 %v590, 2147483648
        %v631 = vxor.u32 %v595, 2147483648
        %v632 = vxor.u32 %v598, 2147483648
        %v633 = vmul.f32 %v601, 1.442695
        %v634 = vpow.pop %v633
        %v635 = vmul.f32 %v602, 1.442695
        %v636 = vpow.pop %v635
        %v637 = vmul.f32 %v603, 1.442695
        %v638 = vpow.pop %v637
        %v639 = vmul.f32 %v604, 1.442695
        %v640 = vpow.pop %v639
        %v641 = vmul.f32 %v605, 1.442695
        %v642 = vpow.pop %v641
        %v643 = vmul.f32 %v606, 1.442695
        %v644 = vpow.pop %v643
        %v645 = vmul.f32 %v607, 1.442695
        %v646 = vpow.pop %v645
        %v647 = vmul.f32 %v608, 1.442695
        %v648 = vpow.pop %v647
        %v649 = vmul.f32 %v609, 1.442695
        %v650 = vpow.pop %v649
        %v651 = vmul.f32 %v610, 1.442695
        %v652 = vpow.pop %v651
        %v653 = vmul.f32 %v611, 1.442695
        %v654 = vpow.pop %v653
        %v655 = vmul.f32 %v612, 1.442695
        %v656 = vpow.pop %v655
        %v657 = vmul.f32 %v613, 1.442695
        %v658 = vpow.pop %v657
        %v659 = vmul.f32 %v614, 1.442695
        %v660 = vpow.pop %v659
        %v661 = vmul.f32 %v615, 1.442695
        %v662 = vpow.pop %v661
        %v663 = vmul.f32 %v616, 1.442695
        %v664 = vpow.pop %v663
        %v665 = vmul.f32 %v617, 1.442695
        %v666 = vpow.pop %v665
        %v667 = vmul.f32 %v618, 1.442695
        %v668 = vpow.pop %v667
        %v669 = vmul.f32 %v619, 1.442695
        %v670 = vpow.pop %v669
        %v671 = vmul.f32 %v620, 1.442695
        %v672 = vpow.pop %v671
        %v673 = vmul.f32 %v621, 1.442695
        %v674 = vpow.pop %v673
        %v675 = vmul.f32 %v622, 1.442695
        %v676 = vpow.pop %v675
        %v677 = vmul.f32 %v623, 1.442695
        %v678 = vpow.pop %v677
        %v679 = vmul.f32 %v624, 1.442695
        %v680 = vpow.pop %v679
        %v681 = vmul.f32 %v625, 1.442695
        %v682 = vpow.pop %v681
        %v683 = vmul.f32 %v626, 1.442695
        %v684 = vpow.pop %v683
        %v685 = vmul.f32 %v627, 1.442695
        %v686 = vpow.pop %v685
        %v687 = vmul.f32 %v628, 1.442695
        %v688 = vpow.pop %v687
        %v689 = vmul.f32 %v629, 1.442695
        %v690 = vpow.pop %v689
        %v691 = vmul.f32 %v630, 1.442695
        %v692 = vpow.pop %v691
        %v693 = vmul.f32 %v631, 1.442695
        %v694 = vpow.pop %v693
        %v695 = vmul.f32 %v632, 1.442695
        %v696 = vpow.pop %v695
        %v697 = vadd.f32 %v634, 1.0
        %v698 = vadd.f32 %v636, 1.0
        %v699 = vadd.f32 %v638, 1.0
        %v700 = vadd.f32 %v640, 1.0
        %v701 = vadd.f32 %v642, 1.0
        %v702 = vadd.f32 %v644, 1.0
        %v703 = vadd.f32 %v646, 1.0
        %v704 = vadd.f32 %v648, 1.0
        %v705 = vadd.f32 %v650, 1.0
        %v706 = vadd.f32 %v652, 1.0
        %v707 = vadd.f32 %v654, 1.0
        %v708 = vadd.f32 %v656, 1.0
        %v709 = vadd.f32 %v658, 1.0
        %v710 = vadd.f32 %v660, 1.0
        %v711 = vadd.f32 %v662, 1.0
        %v712 = vadd.f32 %v664, 1.0
        %v713 = vadd.f32 %v666, 1.0
        %v714 = vadd.f32 %v668, 1.0
        %v715 = vadd.f32 %v670, 1.0
        %v716 = vadd.f32 %v672, 1.0
        %v717 = vadd.f32 %v674, 1.0
        %v718 = vadd.f32 %v676, 1.0
        %v719 = vadd.f32 %v678, 1.0
        %v720 = vadd.f32 %v680, 1.0
        %v721 = vadd.f32 %v682, 1.0
        %v722 = vadd.f32 %v684, 1.0
        %v723 = vadd.f32 %v686, 1.0
        %v724 = vadd.f32 %v688, 1.0
        %v725 = vadd.f32 %v690, 1.0
        %v726 = vadd.f32 %v692, 1.0
        %v727 = vadd.f32 %v694, 1.0
        %v728 = vadd.f32 %v696, 1.0
        %v729 = vrcp.pop %v697
        %v730 = vmul.f32 1.0, %v729
        %v731 = vrcp.pop %v698
        %v732 = vmul.f32 1.0, %v731
        %v733 = vrcp.pop %v699
        %v734 = vmul.f32 1.0, %v733
        %v735 = vrcp.pop %v700
        %v736 = vmul.f32 1.0, %v735
        %v737 = vrcp.pop %v701
        %v738 = vmul.f32 1.0, %v737
        %v739 = vrcp.pop %v702
        %v740 = vmul.f32 1.0, %v739
        %v741 = vrcp.pop %v703
        %v742 = vmul.f32 1.0, %v741
        %v743 = vrcp.pop %v704
        %v744 = vmul.f32 1.0, %v743
        %v745 = vrcp.pop %v705
        %v746 = vmul.f32 1.0, %v745
        %v747 = vrcp.pop %v706
        %v748 = vmul.f32 1.0, %v747
        %v749 = vrcp.pop %v707
        %v750 = vmul.f32 1.0, %v749
        %v751 = vrcp.pop %v708
        %v752 = vmul.f32 1.0, %v751
        %v753 = vrcp.pop %v709
        %v754 = vmul.f32 1.0, %v753
        %v755 = vrcp.pop %v710
        %v756 = vmul.f32 1.0, %v755
        %v757 = vrcp.pop %v711
        %v758 = vmul.f32 1.0, %v757
        %v759 = vrcp.pop %v712
        %v760 = vmul.f32 1.0, %v759
        %v761 = vrcp.pop %v713
        %v762 = vmul.f32 1.0, %v761
        %v763 = vrcp.pop %v714
        %v764 = vmul.f32 1.0, %v763
        %v765 = vrcp.pop %v715
        %v766 = vmul.f32 1.0, %v765
        %v767 = vrcp.pop %v716
        %v768 = vmul.f32 1.0, %v767
        %v769 = vrcp.pop %v717
        %v770 = vmul.f32 1.0, %v769
        %v771 = vrcp.pop %v718
        %v772 = vmul.f32 1.0, %v771
        %v773 = vrcp.pop %v719
        %v774 = vmul.f32 1.0, %v773
        %v775 = vrcp.pop %v720
        %v776 = vmul.f32 1.0, %v775
        %v777 = vrcp.pop %v721
        %v778 = vmul.f32 1.0, %v777
        %v779 = vrcp.pop %v722
        %v780 = vmul.f32 1.0, %v779
        %v781 = vrcp.pop %v723
        %v782 = vmul.f32 1.0, %v781
        %v783 = vrcp.pop %v724
        %v784 = vmul.f32 1.0, %v783
        %v785 = vrcp.pop %v725
        %v786 = vmul.f32 1.0, %v785
        %v787 = vrcp.pop %v726
        %v788 = vmul.f32 1.0, %v787
        %v789 = vrcp.pop %v727
        %v790 = vmul.f32 1.0, %v789
        %v791 = vrcp.pop %v728
        %v792 = vmul.f32 1.0, %v791
        %v793 = vmul.f32 %v475, %v730
        %v794 = vmul.f32 %v478, %v732
        %v795 = vmul.f32 %v483, %v734
        %v796 = vmul.f32 %v486, %v736
        %v797 = vmul.f32 %v491, %v738
        %v798 = vmul.f32 %v494, %v740
        %v799 = vmul.f32 %v499, %v742
        %v800 = vmul.f32 %v502, %v744
        %v801 = vmul.f32 %v507, %v746
        %v802 = vmul.f32 %v510, %v748
        %v803 = vmul.f32 %v515, %v750
        %v804 = vmul.f32 %v518, %v752
        %v805 = vmul.f32 %v523, %v754
        %v806 = vmul.f32 %v526, %v756
        %v807 = vmul.f32 %v531, %v758
        %v808 = vmul.f32 %v534, %v760
        %v809 = vmul.f32 %v539, %v762
        %v810 = vmul.f32 %v542, %v764
        %v811 = vmul.f32 %v547, %v766
        %v812 = vmul.f32 %v550, %v768
        %v813 = vmul.f32 %v555, %v770
        %v814 = vmul.f32 %v558, %v772
        %v815 = vmul.f32 %v563, %v774
        %v816 = vmul.f32 %v566, %v776
        %v817 = vmul.f32 %v571, %v778
        %v818 = vmul.f32 %v574, %v780
        %v819 = vmul.f32 %v579, %v782
        %v820 = vmul.f32 %v582, %v784
        %v821 = vmul.f32 %v587, %v786
        %v822 = vmul.f32 %v590, %v788
        %v823 = vmul.f32 %v595, %v790
        %v824 = vmul.f32 %v598, %v792
        %v825 = vld [vmem:[#allocation2] sm:$0xff]
        %v826 = vadd.f32 %v793, %v794
        %v827 = vadd.f32 %v826, %v795
        %v828 = vadd.f32 %v827, %v796
        %v829 = vadd.f32 %v828, %v797
        %v830 = vadd.f32 %v829, %v798
        %v831 = vadd.f32 %v830, %v799
        %v832 = vadd.f32 %v831, %v800
        %v833 = vadd.f32 %v832, %v801
        %v834 = vadd.f32 %v833, %v802
        %v835 = vadd.f32 %v834, %v803
        %v836 = vadd.f32 %v835, %v804
        %v837 = vadd.f32 %v836, %v805
        %v838 = vadd.f32 %v837, %v806
        %v839 = vadd.f32 %v838, %v807
        %v840 = vadd.f32 %v839, %v808
        %v841 = vadd.f32 %v840, %v809
        %v842 = vadd.f32 %v841, %v810
        %v843 = vadd.f32 %v842, %v811
        %v844 = vadd.f32 %v843, %v812
        %v845 = vadd.f32 %v844, %v813
        %v846 = vadd.f32 %v845, %v814
        %v847 = vadd.f32 %v846, %v815
        %v848 = vadd.f32 %v847, %v816
        %v849 = vadd.f32 %v848, %v817
        %v850 = vadd.f32 %v849, %v818
        %v851 = vadd.f32 %v850, %v819
        %v852 = vadd.f32 %v851, %v820
        %v853 = vadd.f32 %v852, %v821
        %v854 = vadd.f32 %v853, %v822
        %v855 = vadd.f32 %v854, %v823
        %v856 = vadd.f32 %v855, %v824
        %v857 = vadd.f32 %v825, %v856
        %858 = vst [vmem:[#allocation2] sm:$0xff] %v857
        // Predicated region
        $region45: #{forward.1} parent=39 // pred_check
          %p859 = pneg %p251
        $region46: #{forward.1} parent=39 // pred_check_branch
          %861 = sbr.rel (%p859) target = $region48
        $region47: #{forward.1} parent=39 // pred_region
          %v862 = vld [vmem:[#allocation2] sm:$0xff]
          %v863 = vrot.slane %v862, 4
          %v864 = vadd.f32 %v862, %v863
          %v865 = vrot.slane %v864, 2
          %v866 = vadd.f32 %v864, %v865
          %v867 = vrot.slane %v866, 1
          %v868 = vadd.f32 %v866, %v867
          %v869 = vmul.f32 %v868, 0.00390625
          %v870 = vpack.c.bf16 %v869, %v869
          %v871 = vld [vmem:[%s3] sm:$0xf]
          %v872 = vld [vmem:[%s3 + $0x4] sm:$0xf]
          %v873 = vld [vmem:[%s3 + $0x8] sm:$0xf]
          %v874 = vld [vmem:[%s3 + $0xc] sm:$0xf]
          %v875 = vld [vmem:[%s3 + $0x10] sm:$0xf]
          %v876 = vld [vmem:[%s3 + $0x14] sm:$0xf]
          %v877 = vld [vmem:[%s3 + $0x18] sm:$0xf]
          %v878 = vld [vmem:[%s3 + $0x1c] sm:$0xf]
          %v879 = vld [vmem:[%s3 + $0x20] sm:$0xf]
          %v880 = vld [vmem:[%s3 + $0x24] sm:$0xf]
          %v881 = vld [vmem:[%s3 + $0x28] sm:$0xf]
          %v882 = vld [vmem:[%s3 + $0x2c] sm:$0xf]
          %v883 = vld [vmem:[%s3 + $0x30] sm:$0xf]
          %v884 = vld [vmem:[%s3 + $0x34] sm:$0xf]
          %v885 = vld [vmem:[%s3 + $0x38] sm:$0xf]
          %v886 = vld [vmem:[%s3 + $0x3c] sm:$0xf]
          %v887 = vld [vmem:[%s4] sm:$0x1]
          %v904 = vunpack.c.l.b16 %v871
          %v905 = vunpack.c.l.b16 %v872
          %v906 = vunpack.c.l.b16 %v873
          %v907 = vunpack.c.l.b16 %v874
          %v908 = vunpack.c.l.b16 %v875
          %v909 = vunpack.c.l.b16 %v876
          %v910 = vunpack.c.l.b16 %v877
          %v911 = vunpack.c.l.b16 %v878
          %v912 = vunpack.c.l.b16 %v879
          %v913 = vunpack.c.l.b16 %v880
          %v914 = vunpack.c.l.b16 %v881
          %v915 = vunpack.c.l.b16 %v882
          %v916 = vunpack.c.l.b16 %v883
          %v917 = vunpack.c.l.b16 %v884
          %v918 = vunpack.c.l.b16 %v885
          %v919 = vunpack.c.l.b16 %v886
          %v920 = vpack.c.b16 %v905, %v904
          %v921 = vpack.c.b16 %v907, %v906
          %v922 = vpack.c.b16 %v909, %v908
          %v923 = vpack.c.b16 %v911, %v910
          %v924 = vpack.c.b16 %v913, %v912
          %v925 = vpack.c.b16 %v915, %v914
          %v926 = vpack.c.b16 %v917, %v916
          %v927 = vpack.c.b16 %v919, %v918
          %936 = vmatprep.subr.bf16.mxu0 0
          %937 = vmatpush1.bf16.msra.mxu0 %v920
          %938 = vmatprep.subr.bf16.mxu0 0
          %939 = vmatpush1.bf16.msra.mxu0 %v921
          %940 = vmatprep.subr.bf16.mxu0 0
          %941 = vmatpush1.bf16.msra.mxu0 %v922
          %942 = vmatprep.subr.bf16.mxu0 0
          %943 = vmatpush1.bf16.msra.mxu0 %v923
          %944 = vmatprep.subr.bf16.mxu0 0
          %945 = vmatpush1.bf16.msra.mxu0 %v924
          %946 = vmatprep.subr.bf16.mxu0 0
          %947 = vmatpush1.bf16.msra.mxu0 %v925
          %948 = vmatprep.subr.bf16.mxu0 0
          %949 = vmatpush1.bf16.msra.mxu0 %v926
          %950 = vmatprep.subr.bf16.mxu0 0
          %951 = vmatpush1.bf16.msra.mxu0 %v927
          %952 = vmatprep.subr.bf16.mxu0 0
          %953 = vmatpush1.bf16.msra.mxu0 0
          %954 = vmatprep.subr.bf16.mxu0 0
          %955 = vmatpush1.bf16.msra.mxu0 0
          %956 = vmatprep.subr.bf16.mxu0 0
          %957 = vmatpush1.bf16.msra.mxu0 0
          %958 = vmatprep.subr.bf16.mxu0 0
          %959 = vmatpush1.bf16.msra.mxu0 0
          %960 = vmatprep.subr.bf16.mxu0 0
          %961 = vmatpush1.bf16.msra.mxu0 0
          %962 = vmatprep.subr.bf16.mxu0 0
          %963 = vmatpush1.bf16.msra.mxu0 0
          %964 = vmatprep.subr.bf16.mxu0 0
          %965 = vmatpush1.bf16.msra.mxu0 0
          %966 = vmatprep.subr.bf16.mxu0 0
          %967 = vmatpush1.bf16.msra.mxu0 0
          %968 = vmatprep.mubr.bf16.mxu0 0
          %969 = vmatmul.mubr.bf16.gmra.mrb[0].mxu0 %v870
          %v970 = vpop.f32.mrb[0].mxu0
          %v971 = vadd.f32 %v887, %v970
          %v972 = vpop.f32.mrb[0].mxu0
          %v973 = vpop.f32.mrb[0].mxu0
          %v974 = vpop.f32.mrb[0].mxu0
          %975 = vdwg.mxu0
          %976 = vst [vmem:[%s239] sm:$0x1] %v971
        $region48: #{forward.1} parent=39 // pred_fallthru
          _
        %s977 = sand.u32 %s151, 1
        %s978 = scalar_lea.sflag [#allocation4], %s977
        %s979 = sand.u32 %s151, 1
        %s980 = scalar_lea.vmem [#allocation3], %s979
        // Predicated region
        $region49: #{forward.1} parent=39 // pred_check
          %p981 = pneg %p161
        $region50: #{forward.1} parent=39 // pred_check_branch
          %983 = sbr.rel (%p981) target = $region52
        $region51: #{forward.1} parent=39 // pred_region
          %s985 = ssub.s32 16, 16
          %986 = vsyncadd %s978, %s985
          %s987 = smul.addr %s23, 16
          %s988 = scalar_lea.hbm %s5, %s987
          %s990 = sshll.u32 %s980, 4
          %s991 = int_to_ptr.vmem [resolvable:$true] %s990
          %993 = dma.vmem_to_hbm [thread:$0]  %s991, 16, %s988, %s978
        $region52: #{forward.1} parent=39 // pred_fallthru
          _
      $region40: #{forward.1} parent=5 // pred_fallthru
        _
      %p994 = scmp.le.s32.totalorder 2, %s14
      // Predicated region
      $region53: #{forward.1} parent=5 // pred_check
        %p995 = pneg %p994
      $region54: #{forward.1} parent=5 // pred_check_branch
        %997 = sbr.rel (%p995) target = $region56
      $region55: #{forward.1} parent=5 // pred_region
        %s998 = ssub.s32 %s14, 2
        // Predicated region
        $region57: #{forward.1} parent=55 // pred_check
          %p999 = pneg %p167
        $region58: #{forward.1} parent=55 // pred_check_branch
          %1001 = sbr.rel (%p999) target = $region60
        $region59: #{forward.1} parent=55 // pred_region
          %s1002 = sand.u32 %s152, 1
          %s1003 = scalar_lea.sflag [#allocation4], %s1002
          %s1004 = sand.u32 %s152, 1
          %s1005 = scalar_lea.vmem [#allocation3], %s1004
          %1006 = dma.done %s1003, 16
        $region60: #{forward.1} parent=55 // pred_fallthru
          _
      $region56: #{forward.1} parent=5 // pred_fallthru
        _
    $region6: #{forward.1} parent=1 // loop_footer
      %s18 = sadd.s32 1, %s14
    $region7: #{forward.1} parent=1 // loop_footer_branch
      %13 = sbr.rel target = $region3
    $region8: #{forward.1} parent=1 // loop_exit
      _
    %1007 = vsyncpa [#allocation4], 1
    %s1008 = scalar_lea.sflag [#allocation4], 1
    %1009 = vsyncpa %s1008, 1

</llo_original>
